<compile_context>
chip_gen: v5e
topology: v5e:2x2
jax: 0.10.0
libtpu: 0.0.40
codegen_flags: <defaults>
</compile_context>

<pallas_src>
import functools

import jax
import jax.numpy as jnp
from jax.experimental import pallas as pl
from jax.experimental.pallas import tpu as pltpu


# ---------------------------------------------------------------------------
# Tiled matmul kernel (fused QKV projection + out projection)
# ---------------------------------------------------------------------------
def _matmul_kernel(x_ref, w_ref, o_ref, acc_ref):
    @pl.when(pl.program_id(2) == 0)
    def _init():
        acc_ref[...] = jnp.zeros_like(acc_ref)

    acc_ref[...] += jnp.dot(x_ref[...], w_ref[...],
                            preferred_element_type=jnp.float32)

    @pl.when(pl.program_id(2) == pl.num_programs(2) - 1)
    def _store():
        o_ref[...] = acc_ref[...].astype(o_ref.dtype)


def _fit_tile(dim, pref, align):
    """Largest `align`-multiple tile <= pref dividing dim (or the full dim)."""
    if dim <= pref:
        return dim
    t = (pref // align) * align
    while t >= align:
        if dim % t == 0:
            return t
        t -= align
    return dim


def matmul(x, w, *, tm=256, tn=256, tk=512, out_dtype=jnp.float32):
    """(M, K) @ (K, N) -> (M, N); bf16 operands, f32 accumulation."""
    m, k = x.shape
    k2, n = w.shape
    assert k == k2
    tm = _fit_tile(m, tm, 8)
    tn = _fit_tile(n, tn, 128)
    tk = _fit_tile(k, tk, 128)
    grid = (m // tm, n // tn, k // tk)
    return pl.pallas_call(
        _matmul_kernel,
        out_shape=jax.ShapeDtypeStruct((m, n), out_dtype),
        grid_spec=pltpu.PrefetchScalarGridSpec(
            num_scalar_prefetch=0,
            grid=grid,
            in_specs=[pl.BlockSpec((tm, tk), lambda i, j, kk: (i, kk)),
                      pl.BlockSpec((tk, tn), lambda i, j, kk: (kk, j))],
            out_specs=pl.BlockSpec((tm, tn), lambda i, j, kk: (i, j)),
            scratch_shapes=[pltpu.VMEM((tm, tn), jnp.float32)]),
        compiler_params=pltpu.CompilerParams(
            dimension_semantics=("parallel", "parallel", "arbitrary"),
            vmem_limit_bytes=32 * 1024 * 1024),
    )(x, w)


# ---------------------------------------------------------------------------
# Ensemble attention kernel (per batch element: all maps, all heads, GQA,
# in-kernel causal mask, fused RMSNorm, lane-dense (T, embed_dim) output)
# ---------------------------------------------------------------------------
def _ensemble_attn_kernel(mw_ref, q_ref, k_ref, v_ref, g_ref, o_ref, *,
                          num_maps, num_heads, num_kv_heads, eps):
    # q_ref: (1, M, H,   T, D)  bf16  (already scaled by head_dim**-0.5)
    # k_ref: (1, M, KVH, T, D)  bf16
    # v_ref: (1, KVH, T, MD)    bf16
    # g_ref: (1, MD)            f32   (RMSNorm gain)
    # o_ref: (1, T, H*MD)       f32
    n_rep = num_heads // num_kv_heads
    t = q_ref.shape[3]
    d = q_ref.shape[4]
    md = v_ref.shape[3]
    nrt = n_rep * t

    # Causal mask built in-kernel; query row r within a GQA group corresponds
    # to sequence position r % t.
    row = jax.lax.broadcasted_iota(jnp.int32, (num_kv_heads, nrt, t), 1) % t
    col = jax.lax.broadcasted_iota(jnp.int32, (num_kv_heads, nrt, t), 2)
    causal = col <= row

    combined = jnp.zeros((num_kv_heads, nrt, t), jnp.float32)
    for m in range(num_maps):                      # static unroll, M is small
        # Regroup query heads onto their kv head: (H, T, D) -> (KVH, n_rep*T, D)
        qm = q_ref[0, m].reshape(num_kv_heads, nrt, d)
        km = k_ref[0, m]                           # (KVH, T, D)
        s = jnp.einsum('gqd,gkd->gqk', qm, km,
                       preferred_element_type=jnp.float32)     # f32 scores
        s = jnp.where(causal, s, -jnp.inf)
        s_max = jnp.max(s, axis=-1, keepdims=True)
        e = jnp.exp(s - s_max)
        denom = jnp.sum(e, axis=-1, keepdims=True)
        w = e * pl.reciprocal(denom, approx=True)
        combined = combined + mw_ref[m] * w

    v = v_ref[0]                                   # (KVH, T, MD) bf16
    attn = jnp.einsum('gqk,gkd->gqd', combined.astype(v.dtype), v,
                      preferred_element_type=jnp.float32)      # (KVH, nrT, MD)

    # Fused RMSNorm over the last dim (head_dim * num_maps), elementwise gain.
    ms = jnp.mean(attn * attn, axis=-1, keepdims=True)
    attn = attn * jax.lax.rsqrt(ms + eps) * g_ref[...]

    # Write directly in (T, H*MD) = (T, embed_dim) layout (no XLA transpose).
    for g in range(num_kv_heads):
        for r in range(n_rep):
            h = g * n_rep + r
            o_ref[0, :, h * md:(h + 1) * md] = attn[g, r * t:(r + 1) * t, :]


def ensemble_attention(map_weights, q, k, v, rms_g, *,
                       num_maps, num_heads, num_kv_heads, eps=1e-5):
    """q: (B,M,H,T,D) bf16, k: (B,M,KVH,T,D) bf16, v: (B,KVH,T,MD) bf16,
    map_weights: (M,) f32, rms_g: (1,MD) f32  ->  (B, T, H*MD) f32."""
    bsz, _, _, tgt_len, head_dim = q.shape
    md = v.shape[-1]
    embed_dim = num_heads * md
    kernel = functools.partial(_ensemble_attn_kernel, num_maps=num_maps,
                               num_heads=num_heads, num_kv_heads=num_kv_heads,
                               eps=eps)
    grid_spec = pltpu.PrefetchScalarGridSpec(
        num_scalar_prefetch=1,                     # map_weights -> SMEM
        grid=(bsz,),
        in_specs=[
            pl.BlockSpec((1, num_maps, num_heads, tgt_len, head_dim),
                         lambda b, mw: (b, 0, 0, 0, 0)),
            pl.BlockSpec((1, num_maps, num_kv_heads, tgt_len, head_dim),
                         lambda b, mw: (b, 0, 0, 0, 0)),
            pl.BlockSpec((1, num_kv_heads, tgt_len, md),
                         lambda b, mw: (b, 0, 0, 0)),
            pl.BlockSpec((1, md), lambda b, mw: (0, 0)),
        ],
        out_specs=pl.BlockSpec((1, tgt_len, embed_dim),
                               lambda b, mw: (b, 0, 0)),
    )
    # TODO(synk): for long sequences add a KV grid axis with flash-style online
    # softmax so per-map (T,T) score tiles never exceed VMEM (v7x: 64 MiB).
    return pl.pallas_call(
        kernel,
        grid_spec=grid_spec,
        out_shape=jax.ShapeDtypeStruct((bsz, tgt_len, embed_dim), jnp.float32),
        compiler_params=pltpu.CompilerParams(
            dimension_semantics=("parallel",),
            vmem_limit_bytes=32 * 1024 * 1024),
    )(map_weights, q, k, v, rms_g)


# ---------------------------------------------------------------------------
# Plain-JAX glue (rotary, one-time parameter preparation)
# ---------------------------------------------------------------------------
def apply_rotary_emb_interleaved(x, cos, sin):
    """x: (B, T, ..., D); cos/sin: (T, D//2); interleaved rotary."""
    *lead, d = x.shape
    xp = x.reshape(*lead, d // 2, 2)
    x0, x1 = xp[..., 0], xp[..., 1]
    bshape = (1, cos.shape[0]) + (1,) * (x.ndim - 3) + (cos.shape[1],)
    c = cos.reshape(bshape)
    s = sin.reshape(bshape)
    o0 = x0 * c - x1 * s
    o1 = x1 * c + x0 * s
    return jnp.stack([o0, o1], axis=-1).reshape(x.shape)


def prepare_params(params, *, num_heads, num_kv_heads, num_maps):
    """One-time prep: fold head_dim**-0.5 into Q, fuse + transpose + bf16."""
    embed_dim = params["q_w"].shape[-1]
    head_dim = embed_dim // num_heads // num_maps
    scaling = head_dim ** -0.5
    q_w = (params["q_w"] * scaling).reshape(-1, embed_dim)   # (E, E)
    k_w = params["k_w"].reshape(-1, embed_dim)               # (E/n_rep, E)
    v_w = params["v_w"]                                      # (E/n_rep, E)
    w_qkv = jnp.concatenate([q_w, k_w, v_w], axis=0)         # (N_total, E)
    return {
        "w_qkv_t": w_qkv.T.astype(jnp.bfloat16),             # (E, N_total)
        "out_w_t": params["out_w"].T.astype(jnp.bfloat16),   # (E, E)
        "raw_map_weights": params["raw_map_weights"],
        "weight_scale": params["weight_scale"],
        "rms_g": params["rms_g"].reshape(1, -1).astype(jnp.float32),
    }


def multihead_linear_ensemble_attn(x, rel_pos, prepared, *,
                                   num_heads, num_kv_heads, num_maps):
    bsz, tgt_len, embed_dim = x.shape
    head_dim = embed_dim // num_heads // num_maps
    n_rep = num_heads // num_kv_heads
    md = num_maps * head_dim
    e_q = embed_dim
    e_k = embed_dim // n_rep
    cos, sin = rel_pos

    map_weights = (jnp.tanh(prepared["raw_map_weights"]) *
                   prepared["weight_scale"]).reshape(num_maps).astype(jnp.float32)

    # Single fused QKV projection (bf16 MXU operands, f32 accumulation).
    x2d = x.reshape(bsz * tgt_len, embed_dim).astype(jnp.bfloat16)
    qkv = matmul(x2d, prepared["w_qkv_t"])                    # (B*T, E + 2E/n_rep)

    q = qkv[:, :e_q].reshape(bsz, tgt_len, num_maps, num_heads, head_dim)
    k = qkv[:, e_q:e_q + e_k].reshape(bsz, tgt_len, num_maps, num_kv_heads,
                                      head_dim)
    v = qkv[:, e_q + e_k:].reshape(bsz, tgt_len, num_kv_heads, md)

    # Rotary applied once across all maps/heads (interleaved).
    # TODO(synk): fuse rotary + these transposes into the attention kernel
    # (pltpu.roll) to remove the remaining XLA HBM passes over Q/K.
    q = apply_rotary_emb_interleaved(q, cos, sin)
    k = apply_rotary_emb_interleaved(k, cos, sin)

    q = jnp.transpose(q, (0, 2, 3, 1, 4)).astype(jnp.bfloat16)  # (B,M,H,T,D)
    k = jnp.transpose(k, (0, 2, 3, 1, 4)).astype(jnp.bfloat16)  # (B,M,KVH,T,D)
    v = jnp.transpose(v, (0, 2, 1, 3)).astype(jnp.bfloat16)     # (B,KVH,T,MD)

    attn = ensemble_attention(map_weights, q, k, v, prepared["rms_g"],
                              num_maps=num_maps, num_heads=num_heads,
                              num_kv_heads=num_kv_heads)        # (B,T,E) f32

    out = matmul(attn.reshape(bsz * tgt_len, embed_dim).astype(jnp.bfloat16),
                 prepared["out_w_t"])
    return out.reshape(bsz, tgt_len, embed_dim)


# ---------------------------------------------------------------------------
# Pure-JAX reference (unfused, f32) for a loose correctness check
# ---------------------------------------------------------------------------
def reference_forward(x, rel_pos, params, *, num_heads, num_kv_heads, num_maps):
    bsz, tgt_len, embed_dim = x.shape
    head_dim = embed_dim // num_heads // num_maps
    n_rep = num_heads // num_kv_heads
    scaling = head_dim ** -0.5
    md = num_maps * head_dim
    cos, sin = rel_pos
    map_weights = jnp.tanh(params["raw_map_weights"]) * params["weight_scale"]
    mask = jnp.triu(jnp.full((tgt_len, tgt_len), -jnp.inf, jnp.float32), k=1)

    def rep_kv(t):
        b, kvh, s, d = t.shape
        return jnp.broadcast_to(t[:, :, None], (b, kvh, n_rep, s, d)).reshape(
            b, kvh * n_rep, s, d)

    combined = 0.0
    for i in range(num_maps):
        q_i = (x @ params["q_w"][i].T).reshape(bsz, tgt_len, num_heads, head_dim)
        k_i = (x @ params["k_w"][i].T).reshape(bsz, tgt_len, num_kv_heads,
                                               head_dim)
        q_i = apply_rotary_emb_interleaved(q_i, cos, sin)
        k_i = apply_rotary_emb_interleaved(k_i, cos, sin)
        q_i = jnp.transpose(q_i, (0, 2, 1, 3)) * scaling
        k_i = rep_kv(jnp.transpose(k_i, (0, 2, 1, 3)))
        s = jnp.einsum('bhtd,bhsd->bhts', q_i, k_i) + mask
        combined = combined + map_weights[i] * jax.nn.softmax(s, axis=-1)
    v = (x @ params["v_w"].T).reshape(bsz, tgt_len, num_kv_heads, md)
    v = rep_kv(jnp.transpose(v, (0, 2, 1, 3)))
    attn = jnp.einsum('bhts,bhsd->bhtd', combined, v)
    ms = jnp.mean(attn * attn, axis=-1, keepdims=True)
    attn = attn * jax.lax.rsqrt(ms + 1e-5) * params["rms_g"]
    attn = jnp.transpose(attn, (0, 2, 1, 3)).reshape(bsz, tgt_len, embed_dim)
    return attn @ params["out_w"].T


# ---------------------------------------------------------------------------
# Main
# ---------------------------------------------------------------------------
if __name__ == "__main__":
    bsz, tgt_len = 2, 16
    num_heads, num_kv_heads, num_maps = 4, 2, 3
    head_dim = 8
    embed_dim = num_heads * num_maps * head_dim          # 96
    n_rep = num_heads // num_kv_heads                    # 2
    md = num_maps * head_dim                             # 24

    key = jax.random.PRNGKey(0)
    keys = jax.random.split(key, 8)

    params = {
        "q_w": 0.02 * jax.random.normal(
            keys[0], (num_maps, embed_dim // num_maps, embed_dim), jnp.float32),
        "k_w": 0.02 * jax.random.normal(
            keys[1], (num_maps, embed_dim // num_maps // n_rep, embed_dim),
            jnp.float32),
        "v_w": 0.02 * jax.random.normal(
            keys[2], (embed_dim // n_rep, embed_dim), jnp.float32),
        "out_w": 0.02 * jax.random.normal(
            keys[3], (embed_dim, embed_dim), jnp.float32),
        "raw_map_weights": jnp.array(
            [0.1 * (-1.0) ** i for i in range(num_maps)], jnp.float32),
        "weight_scale": jnp.ones((1,), jnp.float32),
        "rms_g": jnp.ones((md,), jnp.float32),
    }

    x = jax.random.normal(keys[4], (bsz, tgt_len, embed_dim), jnp.float32)

    # Rotary tables (interleaved), full head_dim rotation.
    half = head_dim // 2
    inv_freq = 1.0 / (10000.0 ** (jnp.arange(half, dtype=jnp.float32) / half))
    pos = jnp.arange(tgt_len, dtype=jnp.float32)
    ang = pos[:, None] * inv_freq[None, :]               # (T, head_dim//2)
    rel_pos = (jnp.cos(ang), jnp.sin(ang))

    prepared = prepare_params(params, num_heads=num_heads,
                              num_kv_heads=num_kv_heads, num_maps=num_maps)

    out = multihead_linear_ensemble_attn(
        x, rel_pos, prepared,
        num_heads=num_heads, num_kv_heads=num_kv_heads, num_maps=num_maps)
    out = jax.block_until_ready(out)

    assert out.shape == (bsz, tgt_len, embed_dim)
    assert bool(jnp.all(jnp.isfinite(out)))

    ref = jax.block_until_ready(reference_forward(
        x, rel_pos, params, num_heads=num_heads,
        num_kv_heads=num_kv_heads, num_maps=num_maps))
    max_err = float(jnp.max(jnp.abs(out - ref)))
    tol = 2e-2 + 2e-2 * float(jnp.max(jnp.abs(ref)))     # loose (bf16 MXU path)
    assert max_err <= tol, f"max_err={max_err} tol={tol}"

    print("KERNEL_OK")
</pallas_src>

<mosaic_0001>
module attributes {stable_mosaic.version = 11 : i64} {
  func.func @_matmul_kernel(%arg0: i32, %arg1: i32, %arg2: i32, %arg3: memref<32x96xbf16, #tpu.memory_space<vmem>>, %arg4: memref<96x192xbf16, #tpu.memory_space<vmem>>, %arg5: memref<32x192xf32, #tpu.memory_space<vmem>>, %arg6: memref<32x192xf32, #tpu.memory_space<vmem>>) attributes {dimension_semantics = [#tpu.dimension_semantics<parallel>, #tpu.dimension_semantics<parallel>, #tpu.dimension_semantics<arbitrary>], iteration_bounds = array<i64: 1, 1, 1>, scalar_prefetch = 0 : i64, scratch_operands = 1 : i64, tpu.core_type = #tpu.core_type<tc>, window_params = [{transform_indices = @transform_0, window_bounds = array<i64: 32, 96>}, {transform_indices = @transform_1, window_bounds = array<i64: 96, 192>}, {transform_indices = @transform_2, window_bounds = array<i64: 32, 192>}]} {
    %c0_i32 = arith.constant 0 : i32
    %0 = arith.cmpi eq, %arg2, %c0_i32 : i32
    %1 = arith.extui %0 : i1 to i32
    %c0_i32_0 = arith.constant 0 : i32
    %2 = arith.cmpi ne, %1, %c0_i32_0 : i32
    scf.if %2 {
      %cst_10 = arith.constant 0.000000e+00 : f32
      %12 = vector.broadcast %cst_10 : f32 to vector<32x192xf32>
      %c0_11 = arith.constant 0 : index
      %c0_12 = arith.constant 0 : index
      %13 = vector.load %arg6[%c0_11, %c0_12] : memref<32x192xf32, #tpu.memory_space<vmem>>, vector<32x192xf32>
      tpu.vector_store %arg6[%c0_11, %c0_12], %12 {strides = array<i32>} : memref<32x192xf32, #tpu.memory_space<vmem>>, vector<32x192xf32>,
    } else {
    }
    %c0 = arith.constant 0 : index
    %c0_1 = arith.constant 0 : index
    %3 = vector.load %arg6[%c0, %c0_1] : memref<32x192xf32, #tpu.memory_space<vmem>>, vector<32x192xf32>
    %c0_2 = arith.constant 0 : index
    %c0_3 = arith.constant 0 : index
    %4 = vector.load %arg3[%c0_2, %c0_3] : memref<32x96xbf16, #tpu.memory_space<vmem>>, vector<32x96xbf16>
    %c0_4 = arith.constant 0 : index
    %c0_5 = arith.constant 0 : index
    %5 = vector.load %arg4[%c0_4, %c0_5] : memref<96x192xbf16, #tpu.memory_space<vmem>>, vector<96x192xbf16>
    %cst = arith.constant dense<0.000000e+00> : vector<32x192xf32>
    %6 = tpu.matmul %4, %5, %cst {dimension_numbers = #tpu.dot_dimension_numbers<[1], [0], [0], [1], [0, 0, 1, 1], [], []>} : vector<32x96xbf16>, vector<96x192xbf16>, vector<32x192xf32> -> vector<32x192xf32>
    %7 = arith.addf %3, %6 : vector<32x192xf32>
    %c0_6 = arith.constant 0 : index
    %c0_7 = arith.constant 0 : index
    %8 = vector.load %arg6[%c0_6, %c0_7] : memref<32x192xf32, #tpu.memory_space<vmem>>, vector<32x192xf32>
    tpu.vector_store %arg6[%c0_6, %c0_7], %7 {strides = array<i32>} : memref<32x192xf32, #tpu.memory_space<vmem>>, vector<32x192xf32>,
    %c0_i32_8 = arith.constant 0 : i32
    %9 = arith.cmpi eq, %arg2, %c0_i32_8 : i32
    %10 = arith.extui %9 : i1 to i32
    %c0_i32_9 = arith.constant 0 : i32
    %11 = arith.cmpi ne, %10, %c0_i32_9 : i32
    scf.if %11 {
      %c0_10 = arith.constant 0 : index
      %c0_11 = arith.constant 0 : index
      %12 = vector.load %arg6[%c0_10, %c0_11] : memref<32x192xf32, #tpu.memory_space<vmem>>, vector<32x192xf32>
      %c0_12 = arith.constant 0 : index
      %c0_13 = arith.constant 0 : index
      %13 = vector.load %arg5[%c0_12, %c0_13] : memref<32x192xf32, #tpu.memory_space<vmem>>, vector<32x192xf32>
      tpu.vector_store %arg5[%c0_12, %c0_13], %12 {strides = array<i32>} : memref<32x192xf32, #tpu.memory_space<vmem>>, vector<32x192xf32>,
    } else {
    }
    return
  }
  func.func @transform_0(%arg0: i32, %arg1: i32, %arg2: i32) -> (i32, i32) {
    %c0_i32 = arith.constant 0 : i32
    return %arg0, %arg2 : i32, i32
  }
  func.func @transform_1(%arg0: i32, %arg1: i32, %arg2: i32) -> (i32, i32) {
    %c0_i32 = arith.constant 0 : i32
    return %arg2, %arg1 : i32, i32
  }
  func.func @transform_2(%arg0: i32, %arg1: i32, %arg2: i32) -> (i32, i32) {
    %c0_i32 = arith.constant 0 : i32
    return %arg0, %arg1 : i32, i32
  }
}

</mosaic_0001>

<llo_original>
// kernel: tpu_custom_call.1
$region0: #{tpu_custom_call.1}
  #allocation0 [shape = 'u32[]', space=smem, size = 0x4, offset = 0x4, fixed_abs, tag = 'smem constant byte address 0x4 - core index']
  #allocation1 [shape = 'u32[72,128]{1,0:T(1,128)}', space=vmem, size = 0x9000, scoped, tag = 'internal scratch']
  #allocation2 [shape = 'f32[32,192]{1,0:T(8,128)}', space=vmem, size = 0x8000, scoped, tag = 'scratch operand']
  %s0 = inlined_call_operand.hbm [shape: bf16[32,96], index: 0, kind: input, shape index: {}]
  %s1 = inlined_call_operand.hbm [shape: bf16[96,192], index: 1, kind: input, shape index: {}]
  %s2 = inlined_call_operand.hbm [shape: f32[32,192], index: 2, kind: output, shape index: {}]
  %s3 = sld [smem:[#allocation0]]
  $region34: #{tpu_custom_call.1} parent=0
    _
  %s5 = ssub.s32 1, %s3
  %s6 = scalar_select 0, %s5, %s3
  $region1: #{tpu_custom_call.1} parent=0
    #allocation3 [shape = 'u8[8192]{0}', space=vmem, size = 0x2000, scoped, tag = 'input window, operand 0, single buffered']
    #allocation4 [shape = 's32[1]{0}', space=sflag, size = 0x4, scoped, tag = 'scoped memory for tpu_custom_call.1']
    #allocation5 [shape = 's32[1]{0}', space=sflag, size = 0x4, scoped, tag = 'scoped memory for tpu_custom_call.1']
    #allocation6 [shape = 'u8[49152]{0}', space=vmem, size = 0xc000, scoped, tag = 'input window, operand 1, single buffered']
    #allocation7 [shape = 's32[1]{0}', space=sflag, size = 0x4, scoped, tag = 'scoped memory for tpu_custom_call.1']
    #allocation8 [shape = 'u8[32768]{0}', space=vmem, size = 0x8000, scoped, tag = 'output window, operand 0, single buffered']
    %7 = vsyncpa [#allocation4], 0
    %8 = vsyncpa [#allocation7], 0
    %9 = vsyncpa [#allocation5], 0
    // Predicated region
    $region2: #{tpu_custom_call.1} parent=1 // pred_check
      _
    $region3: #{tpu_custom_call.1} parent=1 // pred_check_branch
      %11 = sbr.rel (0) target = $region5
    $region4: #{tpu_custom_call.1} parent=1 // pred_region
      %13 = vsyncadd [#allocation4], 0
      %s14 = sshll.u32 %s0, 4
      %s15 = int_to_ptr.hbm [resolvable:$true] %s14
      %s16 = sshll.u32 [#allocation3], 4
      %s17 = int_to_ptr.vmem [resolvable:$true] %s16
      %22 = dma.hbm_to_vmem [thread:$0]  %s15, 256, %s17, [#allocation4], 64, 64, 4
    $region5: #{tpu_custom_call.1} parent=1 // pred_fallthru
      _
    // Predicated region
    $region6: #{tpu_custom_call.1} parent=1 // pred_check
      _
    $region7: #{tpu_custom_call.1} parent=1 // pred_check_branch
      %24 = sbr.rel (0) target = $region9
    $region8: #{tpu_custom_call.1} parent=1 // pred_region
      %26 = vsyncadd [#allocation7], 0
      %s27 = sshll.u32 %s1, 4
      %s28 = int_to_ptr.hbm [resolvable:$true] %s27
      %s29 = sshll.u32 [#allocation6], 4
      %s30 = int_to_ptr.vmem [resolvable:$true] %s29
      %35 = dma.hbm_to_vmem [thread:$0]  %s28, 1536, %s30, [#allocation7], 128, 128, 8
    $region9: #{tpu_custom_call.1} parent=1 // pred_fallthru
      _
    // Predicated region
    $region10: #{tpu_custom_call.1} parent=1 // pred_check
      _
    $region11: #{tpu_custom_call.1} parent=1 // pred_check_branch
      %37 = sbr.rel (0) target = $region13
    $region12: #{tpu_custom_call.1} parent=1 // pred_region
      %39 = dma.done [#allocation4], 256
    $region13: #{tpu_custom_call.1} parent=1 // pred_fallthru
      _
    // Predicated region
    $region14: #{tpu_custom_call.1} parent=1 // pred_check
      _
    $region15: #{tpu_custom_call.1} parent=1 // pred_check_branch
      %41 = sbr.rel (0) target = $region17
    $region16: #{tpu_custom_call.1} parent=1 // pred_region
      %43 = dma.done [#allocation7], 1536
    $region17: #{tpu_custom_call.1} parent=1 // pred_fallthru
      _
    %p45 = scmp.eq.s32.totalorder 0, 0
    // Predicated region
    $region18: #{tpu_custom_call.1} parent=1 // pred_check
      %p46 = pneg %p45
    $region19: #{tpu_custom_call.1} parent=1 // pred_check_branch
      %48 = sbr.rel (%p46) target = $region21
    $region20: #{tpu_custom_call.1} parent=1 // pred_region
      %49 = vst [vmem:[#allocation2] sm:$0xff] 0.0
      %vm50 = vcmask 523264
      %51 = vst.msk [vmem:[#allocation2 + $0x8] sm:$0xff] %vm50, 0.0
      %52 = vst [vmem:[#allocation2 + $0x10] sm:$0xff] 0.0
      %53 = vst.msk [vmem:[#allocation2 + $0x18] sm:$0xff] %vm50, 0.0
      %54 = vst [vmem:[#allocation2 + $0x20] sm:$0xff] 0.0
      %55 = vst.msk [vmem:[#allocation2 + $0x28] sm:$0xff] %vm50, 0.0
      %56 = vst [vmem:[#allocation2 + $0x30] sm:$0xff] 0.0
      %57 = vst.msk [vmem:[#allocation2 + $0x38] sm:$0xff] %vm50, 0.0
    $region21: #{tpu_custom_call.1} parent=1 // pred_fallthru
      _
    %v58 = vld [vmem:[#allocation2] sm:$0xff]
    %v59 = vld [vmem:[#allocation2 + $0x8] sm:$0xff]
    %v60 = vld [vmem:[#allocation2 + $0x10] sm:$0xff]
    %v61 = vld [vmem:[#allocation2 + $0x18] sm:$0xff]
    %v62 = vld [vmem:[#allocation2 + $0x20] sm:$0xff]
    %v63 = vld [vmem:[#allocation2 + $0x28] sm:$0xff]
    %v64 = vld [vmem:[#allocation2 + $0x30] sm:$0xff]
    %v65 = vld [vmem:[#allocation2 + $0x38] sm:$0xff]
    %v66 = vld [vmem:[#allocation3] sm:$0xf]
    %v67 = vld [vmem:[#allocation3 + $0x4] sm:$0xf]
    %v68 = vld [vmem:[#allocation3 + $0x8] sm:$0xf]
    %v69 = vld [vmem:[#allocation3 + $0xc] sm:$0xf]
    %v70 = vld [vmem:[#allocation6] sm:$0xff]
    %v71 = vld [vmem:[#allocation6 + $0x8] sm:$0xff]
    %v72 = vld [vmem:[#allocation6 + $0x10] sm:$0xff]
    %v73 = vld [vmem:[#allocation6 + $0x18] sm:$0xff]
    %v74 = vld [vmem:[#allocation6 + $0x20] sm:$0xff]
    %v75 = vld [vmem:[#allocation6 + $0x28] sm:$0xff]
    %v76 = vld [vmem:[#allocation6 + $0x30] sm:$0xff]
    %v77 = vld [vmem:[#allocation6 + $0x38] sm:$0xff]
    %v78 = vld [vmem:[#allocation6 + $0x40] sm:$0xff]
    %v79 = vld [vmem:[#allocation6 + $0x48] sm:$0xff]
    %v80 = vld [vmem:[#allocation6 + $0x50] sm:$0xff]
    %v81 = vld [vmem:[#allocation6 + $0x58] sm:$0xff]
    %v86 = vunpack.c.l.b16 %v66
    %v87 = vunpack.c.l.b16 %v67
    %v88 = vunpack.c.l.b16 %v68
    %v89 = vunpack.c.l.b16 %v69
    %v90 = vpack.c.b16 %v87, %v86
    %v91 = vpack.c.b16 %v89, %v88
    %v104 = vunpack.c.l.b16 %v70
    %v105 = vunpack.c.h.b16 %v70
    %v106 = vunpack.c.l.b16 %v71
    %v107 = vunpack.c.h.b16 %v71
    %v108 = vunpack.c.l.b16 %v72
    %v109 = vunpack.c.h.b16 %v72
    %v110 = vunpack.c.l.b16 %v73
    %v111 = vunpack.c.h.b16 %v73
    %v112 = vunpack.c.l.b16 %v74
    %v113 = vunpack.c.h.b16 %v74
    %v114 = vunpack.c.l.b16 %v75
    %v115 = vunpack.c.h.b16 %v75
    %v116 = vunpack.c.l.b16 %v76
    %v117 = vunpack.c.h.b16 %v76
    %v118 = vunpack.c.l.b16 %v77
    %v119 = vunpack.c.h.b16 %v77
    %v120 = vunpack.c.l.b16 %v78
    %v121 = vunpack.c.h.b16 %v78
    %v122 = vunpack.c.l.b16 %v79
    %v123 = vunpack.c.h.b16 %v79
    %v124 = vunpack.c.l.b16 %v80
    %v125 = vunpack.c.h.b16 %v80
    %v126 = vunpack.c.l.b16 %v81
    %v127 = vunpack.c.h.b16 %v81
    %v128 = vpack.c.b16 %v106, %v104
    %v129 = vpack.c.b16 %v107, %v105
    %v130 = vpack.c.b16 %v110, %v108
    %v131 = vpack.c.b16 %v111, %v109
    %v132 = vpack.c.b16 %v114, %v112
    %v133 = vpack.c.b16 %v115, %v113
    %v134 = vpack.c.b16 %v118, %v116
    %v135 = vpack.c.b16 %v119, %v117
    %v136 = vpack.c.b16 %v122, %v120
    %v137 = vpack.c.b16 %v123, %v121
    %v138 = vpack.c.b16 %v126, %v124
    %v139 = vpack.c.b16 %v127, %v125
    %vm152 = vcmask 785408
    %v154 = vsel %vm152, %v90, 0
    %v157 = vsel %vm152, %v91, 0
    %159 = vmatpush.bf16.msra.mxu0 0
    %160 = vmatpush.bf16.msra.mxu0 0
    %161 = vmatpush.bf16.msra.mxu0 %v138
    %162 = vmatpush.bf16.msra.mxu0 %v136
    %163 = vmatpush.bf16.msra.mxu0 %v134
    %164 = vmatpush.bf16.msra.mxu0 %v132
    %165 = vmatpush.bf16.msra.mxu0 %v130
    %166 = vmatpush.bf16.msra.mxu0 %v128
    %167 = vmatmul.bf16.gmra.mxu0 %v154
    %v168 = vpop.f32.mrf.mxu0
    %v169 = vadd.f32 0.0, %v168
    %v170 = vpop.f32.mrf.mxu0
    %v171 = vadd.f32 0.0, %v170
    %172 = vmatmul.bf16.gmra.mxu0 %v157
    %v173 = vpop.f32.mrf.mxu0
    %v174 = vadd.f32 0.0, %v173
    %v175 = vpop.f32.mrf.mxu0
    %v176 = vadd.f32 0.0, %v175
    %177 = vdwg.mxu0
    %178 = vmatpush.bf16.msra.mxu0 0
    %179 = vmatpush.bf16.msra.mxu0 0
    %180 = vmatpush.bf16.msra.mxu0 %v139
    %181 = vmatpush.bf16.msra.mxu0 %v137
    %182 = vmatpush.bf16.msra.mxu0 %v135
    %183 = vmatpush.bf16.msra.mxu0 %v133
    %184 = vmatpush.bf16.msra.mxu0 %v131
    %185 = vmatpush.bf16.msra.mxu0 %v129
    %186 = vmatmul.bf16.gmra.mxu0 %v154
    %v187 = vpop.f32.mrf.mxu0
    %v188 = vadd.f32 0.0, %v187
    %v189 = vpop.f32.mrf.mxu0
    %v190 = vadd.f32 0.0, %v189
    %191 = vmatmul.bf16.gmra.mxu0 %v157
    %v192 = vpop.f32.mrf.mxu0
    %v193 = vadd.f32 0.0, %v192
    %v194 = vpop.f32.mrf.mxu0
    %v195 = vadd.f32 0.0, %v194
    %196 = vdwg.mxu0
    %v197 = vadd.f32 %v58, %v169
    %v198 = vadd.f32 %v59, %v188
    %v199 = vadd.f32 %v60, %v171
    %v200 = vadd.f32 %v61, %v190
    %v201 = vadd.f32 %v62, %v174
    %v202 = vadd.f32 %v63, %v193
    %v203 = vadd.f32 %v64, %v176
    %v204 = vadd.f32 %v65, %v195
    %205 = vst [vmem:[#allocation2] sm:$0xff] %v197
    %vm206 = vcmask 523264
    %207 = vst.msk [vmem:[#allocation2 + $0x8] sm:$0xff] %vm206, %v198
    %208 = vst [vmem:[#allocation2 + $0x10] sm:$0xff] %v199
    %209 = vst.msk [vmem:[#allocation2 + $0x18] sm:$0xff] %vm206, %v200
    %210 = vst [vmem:[#allocation2 + $0x20] sm:$0xff] %v201
    %211 = vst.msk [vmem:[#allocation2 + $0x28] sm:$0xff] %vm206, %v202
    %212 = vst [vmem:[#allocation2 + $0x30] sm:$0xff] %v203
    %213 = vst.msk [vmem:[#allocation2 + $0x38] sm:$0xff] %vm206, %v204
    // Predicated region
    $region22: #{tpu_custom_call.1} parent=1 // pred_check
      %p214 = pneg %p45
    $region23: #{tpu_custom_call.1} parent=1 // pred_check_branch
      %216 = sbr.rel (%p214) target = $region25
    $region24: #{tpu_custom_call.1} parent=1 // pred_region
      %v217 = vld [vmem:[#allocation2] sm:$0xff]
      %v218 = vld [vmem:[#allocation2 + $0x8] sm:$0xff]
      %v219 = vld [vmem:[#allocation2 + $0x10] sm:$0xff]
      %v220 = vld [vmem:[#allocation2 + $0x18] sm:$0xff]
      %v221 = vld [vmem:[#allocation2 + $0x20] sm:$0xff]
      %v222 = vld [vmem:[#allocation2 + $0x28] sm:$0xff]
      %v223 = vld [vmem:[#allocation2 + $0x30] sm:$0xff]
      %v224 = vld [vmem:[#allocation2 + $0x38] sm:$0xff]
      %225 = vst [vmem:[#allocation8] sm:$0xff] %v217
      %226 = vst.msk [vmem:[#allocation8 + $0x8] sm:$0xff] %vm206, %v218
      %227 = vst [vmem:[#allocation8 + $0x10] sm:$0xff] %v219
      %228 = vst.msk [vmem:[#allocation8 + $0x18] sm:$0xff] %vm206, %v220
      %229 = vst [vmem:[#allocation8 + $0x20] sm:$0xff] %v221
      %230 = vst.msk [vmem:[#allocation8 + $0x28] sm:$0xff] %vm206, %v222
      %231 = vst [vmem:[#allocation8 + $0x30] sm:$0xff] %v223
      %232 = vst.msk [vmem:[#allocation8 + $0x38] sm:$0xff] %vm206, %v224
    $region25: #{tpu_custom_call.1} parent=1 // pred_fallthru
      _
    // Predicated region
    $region26: #{tpu_custom_call.1} parent=1 // pred_check
      _
    $region27: #{tpu_custom_call.1} parent=1 // pred_check_branch
      %234 = sbr.rel (0) target = $region29
    $region28: #{tpu_custom_call.1} parent=1 // pred_region
      %236 = vsyncadd [#allocation5], 0
      %s237 = sshll.u32 [#allocation8], 4
      %s238 = int_to_ptr.vmem [resolvable:$true] %s237
      %s239 = sshll.u32 %s2, 4
      %s240 = int_to_ptr.hbm [resolvable:$true] %s239
      %245 = dma.vmem_to_hbm [thread:$0]  %s238, 1024, %s240, [#allocation5], 256, 256, 16
    $region29: #{tpu_custom_call.1} parent=1 // pred_fallthru
      _
    // Predicated region
    $region30: #{tpu_custom_call.1} parent=1 // pred_check
      _
    $region31: #{tpu_custom_call.1} parent=1 // pred_check_branch
      %247 = sbr.rel (0) target = $region33
    $region32: #{tpu_custom_call.1} parent=1 // pred_region
      %249 = dma.done [#allocation5], 1024
    $region33: #{tpu_custom_call.1} parent=1 // pred_fallthru
      _
    %250 = vsyncpa [#allocation4], 1
    %251 = vsyncpa [#allocation7], 1
    %252 = vsyncpa [#allocation5], 1

</llo_original>
